<compile_context>
chip_gen: v6e
topology: v6e:2x2x1
jax: 0.10.0
libtpu: 0.0.40
codegen_flags: <defaults>
</compile_context>

<pallas_src>
import functools

import jax
import jax.numpy as jnp
from jax.experimental import pallas as pl
from jax.experimental.pallas import tpu as pltpu


def _mlp_kernel(x_ref, w1_ref, b1_ref, w2_ref, b2_ref, mask_ref, o_ref):
    # x_ref:    (TM, D_in)
    # w1_ref:   (D_in, H)     b1_ref: (1, H)
    # w2_ref:   (H, D_out)    b2_ref: (1, D_out)
    # mask_ref: (TM, H)       pre-scaled dropout keep-mask (ones in eval mode)
    # o_ref:    (TM, D_out)
    x = x_ref[...]
    h = jnp.dot(x, w1_ref[...], preferred_element_type=jnp.float32)
    h = h + b1_ref[...].astype(jnp.float32)            # (1, H) broadcasts over rows
    h = jnp.maximum(h, 0.0)                            # ReLU
    h = h * mask_ref[...].astype(jnp.float32)          # fused (scaled) dropout
    y = jnp.dot(h.astype(w2_ref.dtype), w2_ref[...],
                preferred_element_type=jnp.float32)
    y = y + b2_ref[...].astype(jnp.float32)
    o_ref[...] = y.astype(o_ref.dtype)


def _round_up(a: int, b: int) -> int:
    return (a + b - 1) // b * b


@functools.partial(jax.jit, static_argnames=("dropout_p", "training", "row_tile"))
def projection_network(x, w1, b1, w2, b2, *, dropout_p: float = 0.5,
                       training: bool = False, dropout_key=None,
                       row_tile: int = 256):
    """x: (..., D_in); w1: (D_in, H); b1: (H,); w2: (H, D_out); b2: (D_out,)."""
    orig_shape = x.shape
    d_in = orig_shape[-1]
    hid = w1.shape[1]
    d_out = w2.shape[1]

    # Flatten leading dims to rows and pad rows to a sublane-friendly tile.
    m = 1
    for s in orig_shape[:-1]:
        m *= s
    x2 = x.reshape(m, d_in)

    m_pad = _round_up(m, 8)
    tm = min(row_tile, m_pad)
    m_pad = _round_up(m_pad, tm)
    if m_pad != m:
        x2 = jnp.pad(x2, ((0, m_pad - m), (0, 0)))

    # Pre-scaled dropout keep-mask (identity in eval mode, matching nn.Dropout.eval()).
    if training and dropout_p > 0.0:
        keep = jax.random.bernoulli(dropout_key, 1.0 - dropout_p, (m_pad, hid))
        mask = keep.astype(jnp.float32) / (1.0 - dropout_p)
    else:
        # TODO(synk): in eval mode the all-ones mask read could be elided with a
        # mask-free kernel variant to save a little HBM bandwidth.
        mask = jnp.ones((m_pad, hid), jnp.float32)
    mask = mask.astype(x.dtype)

    b1_2 = b1.reshape(1, hid)
    b2_2 = b2.reshape(1, d_out)

    grid = (m_pad // tm,)

    # Rough per-step VMEM budget (double-buffered ins/outs + f32 temps), with headroom.
    bpe = jnp.dtype(x.dtype).itemsize
    step_bytes = 2 * bpe * (tm * d_in + d_in * hid + hid + hid * d_out + d_out
                            + tm * hid + tm * d_out) + 4 * 3 * tm * max(hid, d_out)
    vmem_limit = min(max(4 * step_bytes, 8 << 20), 96 << 20)

    out = pl.pallas_call(
        _mlp_kernel,
        out_shape=jax.ShapeDtypeStruct((m_pad, d_out), x.dtype),
        grid_spec=pltpu.PrefetchScalarGridSpec(
            num_scalar_prefetch=0,
            grid=grid,
            in_specs=[
                pl.BlockSpec((tm, d_in), lambda i: (i, 0)),
                pl.BlockSpec((d_in, hid), lambda i: (0, 0)),   # resident weights
                pl.BlockSpec((1, hid), lambda i: (0, 0)),
                pl.BlockSpec((hid, d_out), lambda i: (0, 0)),
                pl.BlockSpec((1, d_out), lambda i: (0, 0)),
                pl.BlockSpec((tm, hid), lambda i: (i, 0)),
            ],
            out_specs=pl.BlockSpec((tm, d_out), lambda i: (i, 0)),
        ),
        compiler_params=pltpu.CompilerParams(
            dimension_semantics=("parallel",),
            vmem_limit_bytes=int(vmem_limit),
        ),
    )(x2, w1, b1_2, w2, b2_2, mask)

    out = out[:m]
    return out.reshape(*orig_shape[:-1], d_out)


def _reference_mlp(x, w1, b1, w2, b2, drop_mask=None):
    h = jnp.maximum(x @ w1 + b1, 0.0)
    if drop_mask is not None:
        h = h * drop_mask
    return h @ w2 + b2


if __name__ == "__main__":
    key = jax.random.PRNGKey(0)
    k_x, k_w1, k_b1, k_w2, k_b2, k_drop = jax.random.split(key, 6)

    # Small shapes consistent with the module: batch=2, seq=8, input_dim=32,
    # proj_dim=16 -> hidden_dim = (32 + 16) // 2 = 24.
    B, S, D_IN, D_OUT = 2, 8, 32, 16
    HID = (D_IN + D_OUT) // 2

    x = jax.random.normal(k_x, (B, S, D_IN), dtype=jnp.float32)

    # nn.Linear-style init: U(-1/sqrt(fan_in), 1/sqrt(fan_in)); stored transposed
    # (in, out) so the kernel computes x @ W directly.
    lim1 = 1.0 / (D_IN ** 0.5)
    lim2 = 1.0 / (HID ** 0.5)
    w1 = jax.random.uniform(k_w1, (D_IN, HID), jnp.float32, -lim1, lim1)
    b1 = jax.random.uniform(k_b1, (HID,), jnp.float32, -lim1, lim1)
    w2 = jax.random.uniform(k_w2, (HID, D_OUT), jnp.float32, -lim2, lim2)
    b2 = jax.random.uniform(k_b2, (D_OUT,), jnp.float32, -lim2, lim2)

    # Eval mode (dropout is identity, matching module.eval()).
    out_eval = projection_network(x, w1, b1, w2, b2, training=False)
    out_eval = jax.block_until_ready(out_eval)
    ref_eval = _reference_mlp(x, w1, b1, w2, b2)
    assert out_eval.shape == (B, S, D_OUT)
    assert jnp.allclose(out_eval, ref_eval, atol=1e-5, rtol=1e-5), "eval mismatch"

    # Training mode: dropout mask generated deterministically in the wrapper and
    # fused in the kernel; compare against the same mask applied in pure JAX.
    M = B * S
    keep = jax.random.bernoulli(k_drop, 0.5, (M, HID))
    mask_ref = (keep.astype(jnp.float32) / 0.5).reshape(B, S, HID)
    out_train = projection_network(x, w1, b1, w2, b2, dropout_p=0.5,
                                   training=True, dropout_key=k_drop)
    out_train = jax.block_until_ready(out_train)
    ref_train = _reference_mlp(x, w1, b1, w2, b2, drop_mask=mask_ref)
    assert jnp.allclose(out_train, ref_train, atol=1e-5, rtol=1e-5), "train mismatch"

    print("KERNEL_OK")
</pallas_src>

<mosaic_0001>
module attributes {stable_mosaic.version = 11 : i64} {
  func.func @_mlp_kernel(%arg0: i32, %arg1: memref<16x32xf32, #tpu.memory_space<vmem>>, %arg2: memref<32x24xf32, #tpu.memory_space<vmem>>, %arg3: memref<1x24xf32, #tpu.memory_space<vmem>>, %arg4: memref<24x16xf32, #tpu.memory_space<vmem>>, %arg5: memref<1x16xf32, #tpu.memory_space<vmem>>, %arg6: memref<16x24xf32, #tpu.memory_space<vmem>>, %arg7: memref<16x16xf32, #tpu.memory_space<vmem>>) attributes {dimension_semantics = [#tpu.dimension_semantics<parallel>], iteration_bounds = array<i64: 1>, scalar_prefetch = 0 : i64, scratch_operands = 0 : i64, tpu.core_type = #tpu.core_type<tc>, window_params = [{transform_indices = @transform_0, window_bounds = array<i64: 16, 32>}, {pipeline_mode = #tpu.pipeline_mode<synchronous>, transform_indices = @transform_1, window_bounds = array<i64: 32, 24>}, {pipeline_mode = #tpu.pipeline_mode<synchronous>, transform_indices = @transform_2, window_bounds = array<i64: 1, 24>}, {pipeline_mode = #tpu.pipeline_mode<synchronous>, transform_indices = @transform_3, window_bounds = array<i64: 24, 16>}, {pipeline_mode = #tpu.pipeline_mode<synchronous>, transform_indices = @transform_4, window_bounds = array<i64: 1, 16>}, {transform_indices = @transform_5, window_bounds = array<i64: 16, 24>}, {transform_indices = @transform_6, window_bounds = array<i64: 16, 16>}]} {
    %c0 = arith.constant 0 : index
    %c0_0 = arith.constant 0 : index
    %0 = vector.load %arg1[%c0, %c0_0] : memref<16x32xf32, #tpu.memory_space<vmem>>, vector<16x32xf32>
    %c0_1 = arith.constant 0 : index
    %c0_2 = arith.constant 0 : index
    %1 = vector.load %arg2[%c0_1, %c0_2] : memref<32x24xf32, #tpu.memory_space<vmem>>, vector<32x24xf32>
    %cst = arith.constant dense<0.000000e+00> : vector<16x24xf32>
    %2 = tpu.matmul %0, %1, %cst {dimension_numbers = #tpu.dot_dimension_numbers<[1], [0], [0], [1], [0, 0, 1, 1], [], []>} : vector<16x32xf32>, vector<32x24xf32>, vector<16x24xf32> -> vector<16x24xf32>
    %c0_3 = arith.constant 0 : index
    %c0_4 = arith.constant 0 : index
    %3 = vector.load %arg3[%c0_3, %c0_4] : memref<1x24xf32, #tpu.memory_space<vmem>>, vector<1x24xf32>
    %4 = vector.broadcast %3 : vector<1x24xf32> to vector<16x24xf32>
    %5 = arith.addf %2, %4 : vector<16x24xf32>
    %cst_5 = arith.constant 0.000000e+00 : f32
    %6 = vector.broadcast %cst_5 : f32 to vector<16x24xf32>
    %7 = arith.maximumf %5, %6 : vector<16x24xf32>
    %c0_6 = arith.constant 0 : index
    %c0_7 = arith.constant 0 : index
    %8 = vector.load %arg6[%c0_6, %c0_7] : memref<16x24xf32, #tpu.memory_space<vmem>>, vector<16x24xf32>
    %9 = arith.mulf %7, %8 : vector<16x24xf32>
    %c0_8 = arith.constant 0 : index
    %c0_9 = arith.constant 0 : index
    %10 = vector.load %arg4[%c0_8, %c0_9] : memref<24x16xf32, #tpu.memory_space<vmem>>, vector<24x16xf32>
    %cst_10 = arith.constant dense<0.000000e+00> : vector<16x16xf32>
    %11 = tpu.matmul %9, %10, %cst_10 {dimension_numbers = #tpu.dot_dimension_numbers<[1], [0], [0], [1], [0, 0, 1, 1], [], []>} : vector<16x24xf32>, vector<24x16xf32>, vector<16x16xf32> -> vector<16x16xf32>
    %c0_11 = arith.constant 0 : index
    %c0_12 = arith.constant 0 : index
    %12 = vector.load %arg5[%c0_11, %c0_12] : memref<1x16xf32, #tpu.memory_space<vmem>>, vector<1x16xf32>
    %13 = vector.broadcast %12 : vector<1x16xf32> to vector<16x16xf32>
    %14 = arith.addf %11, %13 : vector<16x16xf32>
    %c0_13 = arith.constant 0 : index
    %c0_14 = arith.constant 0 : index
    %15 = vector.load %arg7[%c0_13, %c0_14] : memref<16x16xf32, #tpu.memory_space<vmem>>, vector<16x16xf32>
    tpu.vector_store %arg7[%c0_13, %c0_14], %14 {strides = array<i32>} : memref<16x16xf32, #tpu.memory_space<vmem>>, vector<16x16xf32>,
    return
  }
  func.func @transform_0(%arg0: i32) -> (i32, i32) {
    %c0_i32 = arith.constant 0 : i32
    %c0_i32_0 = arith.constant 0 : i32
    return %arg0, %c0_i32 : i32, i32
  }
  func.func @transform_1(%arg0: i32) -> (i32, i32) {
    %c0_i32 = arith.constant 0 : i32
    %c0_i32_0 = arith.constant 0 : i32
    %c0_i32_1 = arith.constant 0 : i32
    return %c0_i32, %c0_i32_0 : i32, i32
  }
  func.func @transform_2(%arg0: i32) -> (i32, i32) {
    %c0_i32 = arith.constant 0 : i32
    %c0_i32_0 = arith.constant 0 : i32
    %c0_i32_1 = arith.constant 0 : i32
    return %c0_i32, %c0_i32_0 : i32, i32
  }
  func.func @transform_3(%arg0: i32) -> (i32, i32) {
    %c0_i32 = arith.constant 0 : i32
    %c0_i32_0 = arith.constant 0 : i32
    %c0_i32_1 = arith.constant 0 : i32
    return %c0_i32, %c0_i32_0 : i32, i32
  }
  func.func @transform_4(%arg0: i32) -> (i32, i32) {
    %c0_i32 = arith.constant 0 : i32
    %c0_i32_0 = arith.constant 0 : i32
    %c0_i32_1 = arith.constant 0 : i32
    return %c0_i32, %c0_i32_0 : i32, i32
  }
  func.func @transform_5(%arg0: i32) -> (i32, i32) {
    %c0_i32 = arith.constant 0 : i32
    %c0_i32_0 = arith.constant 0 : i32
    return %arg0, %c0_i32 : i32, i32
  }
  func.func @transform_6(%arg0: i32) -> (i32, i32) {
    %c0_i32 = arith.constant 0 : i32
    %c0_i32_0 = arith.constant 0 : i32
    return %arg0, %c0_i32 : i32, i32
  }
}

</mosaic_0001>

<llo_original>
// kernel: projection_network.1
$region0: #{projection_network.1}
  #allocation0 [shape = 'u32[]', space=smem, size = 0x4, offset = 0x4, fixed_abs, tag = 'smem constant byte address 0x4 - core index']
  #allocation1 [shape = 'u32[144,128]{1,0:T(1,128)}', space=vmem, size = 0x12000, scoped, tag = 'internal scratch']
  %s0 = inlined_call_operand.vmem [shape: f32[16,32], index: 0, kind: input, shape index: {}]
  %s1 = inlined_call_operand.vmem [shape: f32[32,24], index: 1, kind: input, shape index: {}]
  %s2 = inlined_call_operand.vmem [shape: f32[1,24], index: 2, kind: input, shape index: {}]
  %s3 = inlined_call_operand.vmem [shape: f32[24,16], index: 3, kind: input, shape index: {}]
  %s4 = inlined_call_operand.vmem [shape: f32[1,16], index: 4, kind: input, shape index: {}]
  %s5 = inlined_call_operand.vmem [shape: f32[16,24], index: 5, kind: input, shape index: {}]
  %s6 = inlined_call_operand.hbm [shape: f32[16,16], index: 6, kind: output, shape index: {}]
  %s7 = sld [smem:[#allocation0]]
  $region34: #{projection_network.1} parent=0
    _
  %s9 = ssub.s32 1, %s7
  %s10 = scalar_select 0, %s9, %s7
  $region1: #{projection_network.1} parent=0
    #allocation2 [shape = 'u8[8192]{0}', space=vmem, size = 0x2000, scoped, tag = 'output window, operand 0, single buffered']
    #allocation3 [shape = 's32[1]{0}', space=sflag, size = 0x4, scoped, tag = 'scoped memory for projection_network.1']
    %11 = vsyncpa [#allocation3], 0
    // Predicated region
    $region2: #{projection_network.1} parent=1 // pred_check
      _
    $region3: #{projection_network.1} parent=1 // pred_check_branch
      %13 = sbr.rel (0) target = $region5
    $region4: #{projection_network.1} parent=1 // pred_region
      _
    $region5: #{projection_network.1} parent=1 // pred_fallthru
      _
    // Predicated region
    $region6: #{projection_network.1} parent=1 // pred_check
      _
    $region7: #{projection_network.1} parent=1 // pred_check_branch
      %15 = sbr.rel (0) target = $region9
    $region8: #{projection_network.1} parent=1 // pred_region
      _
    $region9: #{projection_network.1} parent=1 // pred_fallthru
      _
    // Predicated region
    $region10: #{projection_network.1} parent=1 // pred_check
      _
    $region11: #{projection_network.1} parent=1 // pred_check_branch
      %17 = sbr.rel (0) target = $region13
    $region12: #{projection_network.1} parent=1 // pred_region
      _
    $region13: #{projection_network.1} parent=1 // pred_fallthru
      _
    // Predicated region
    $region14: #{projection_network.1} parent=1 // pred_check
      _
    $region15: #{projection_network.1} parent=1 // pred_check_branch
      %19 = sbr.rel (0) target = $region17
    $region16: #{projection_network.1} parent=1 // pred_region
      _
    $region17: #{projection_network.1} parent=1 // pred_fallthru
      _
    // Predicated region
    $region18: #{projection_network.1} parent=1 // pred_check
      _
    $region19: #{projection_network.1} parent=1 // pred_check_branch
      %21 = sbr.rel (0) target = $region21
    $region20: #{projection_network.1} parent=1 // pred_region
      _
    $region21: #{projection_network.1} parent=1 // pred_fallthru
      _
    // Predicated region
    $region22: #{projection_network.1} parent=1 // pred_check
      _
    $region23: #{projection_network.1} parent=1 // pred_check_branch
      %23 = sbr.rel (0) target = $region25
    $region24: #{projection_network.1} parent=1 // pred_region
      _
    $region25: #{projection_network.1} parent=1 // pred_fallthru
      _
    %v24 = vld [vmem:[%s0] sm:$0xff]
    %v25 = vld [vmem:[%s0 + $0x8] sm:$0xff]
    %v26 = vld [vmem:[%s1] sm:$0xff]
    %v27 = vld [vmem:[%s1 + $0x8] sm:$0xff]
    %v28 = vld [vmem:[%s1 + $0x10] sm:$0xff]
    %v29 = vld [vmem:[%s1 + $0x18] sm:$0xff]
    %v30 = vld [vmem:[%s2] sm:$0x1]
    %v32 = vlaneseq
    %v33 = vshrl.u32 %v32, 7
    %v34 = vsub.s32 0, %v33
    %v35 = vrot.slane %v30, %v34
    %vm37 = vcmask 261120
    %v39 = vsel %vm37, %v24, 0
    %v42 = vsel %vm37, %v25, 0
    %44 = vmatprep.subr.mxu0 0.0
    %45 = vmatpush1.msra.mxu0 0.0
    %46 = vmatprep.subr.mxu0 0.0
    %47 = vmatpush1.msra.mxu0 0.0
    %48 = vmatprep.subr.mxu0 0.0
    %49 = vmatpush1.msra.mxu0 0.0
    %50 = vmatprep.subr.mxu0 0.0
    %51 = vmatpush1.msra.mxu0 0.0
    %52 = vmatprep.subr.mxu0 0.0
    %53 = vmatpush1.msra.mxu0 0.0
    %54 = vmatprep.subr.mxu0 0.0
    %55 = vmatpush1.msra.mxu0 0.0
    %56 = vmatprep.subr.mxu0 0.0
    %57 = vmatpush1.msra.mxu0 0.0
    %58 = vmatprep.subr.mxu0 0.0
    %59 = vmatpush1.msra.mxu0 0.0
    %60 = vmatprep.subr.mxu0 0.0
    %61 = vmatpush1.msra.mxu0 0.0
    %62 = vmatprep.subr.mxu0 0.0
    %63 = vmatpush1.msra.mxu0 0.0
    %64 = vmatprep.subr.mxu0 0.0
    %65 = vmatpush1.msra.mxu0 0.0
    %66 = vmatprep.subr.mxu0 0.0
    %67 = vmatpush1.msra.mxu0 0.0
    %68 = vmatprep.subr.mxu0 0.0
    %69 = vmatpush1.msra.mxu0 %v29
    %70 = vmatprep.subr.mxu0 0.0
    %71 = vmatpush1.msra.mxu0 %v28
    %72 = vmatprep.subr.mxu0 0.0
    %73 = vmatpush1.msra.mxu0 %v27
    %74 = vmatprep.subr.mxu0 0.0
    %75 = vmatpush1.msra.mxu0 %v26
    %76 = vmatprep.subr.mxu0 0.0
    %77 = vmatpush2.msra.mxu0 0.0
    %78 = vmatprep.subr.mxu0 0.0
    %79 = vmatpush2.msra.mxu0 0.0
    %80 = vmatprep.subr.mxu0 0.0
    %81 = vmatpush2.msra.mxu0 0.0
    %82 = vmatprep.subr.mxu0 0.0
    %83 = vmatpush2.msra.mxu0 0.0
    %84 = vmatprep.subr.mxu0 0.0
    %85 = vmatpush2.msra.mxu0 0.0
    %86 = vmatprep.subr.mxu0 0.0
    %87 = vmatpush2.msra.mxu0 0.0
    %88 = vmatprep.subr.mxu0 0.0
    %89 = vmatpush2.msra.mxu0 0.0
    %90 = vmatprep.subr.mxu0 0.0
    %91 = vmatpush2.msra.mxu0 0.0
    %92 = vmatprep.subr.mxu0 0.0
    %93 = vmatpush2.msra.mxu0 0.0
    %94 = vmatprep.subr.mxu0 0.0
    %95 = vmatpush2.msra.mxu0 0.0
    %96 = vmatprep.subr.mxu0 0.0
    %97 = vmatpush2.msra.mxu0 0.0
    %98 = vmatprep.subr.mxu0 0.0
    %99 = vmatpush2.msra.mxu0 0.0
    %100 = vmatprep.subr.mxu0 0.0
    %101 = vmatpush2.msra.mxu0 0.0
    %102 = vmatprep.subr.mxu0 0.0
    %103 = vmatpush2.msra.mxu0 0.0
    %104 = vmatprep.subr.mxu0 0.0
    %105 = vmatpush2.msra.mxu0 0.0
    %106 = vmatprep.subr.mxu0 0.0
    %107 = vmatpush2.msra.mxu0 0.0
    %108 = vmatprep.mubr.f32.mxu0 0.0
    %109 = vmatmul.mubr.f32.gmra.mxu0 %v39
    %v110 = vpop.f32.mrf.mxu0
    %v111 = vadd.f32 %v35, %v110
    %v112 = vpop.f32.mrf.mxu0
    %113 = vmatprep.mubr.f32.mxu0 0.0
    %114 = vmatmul.mubr.f32.gmra.mxu0 %v42
    %v115 = vpop.f32.mrf.mxu0
    %v116 = vadd.f32 %v35, %v115
    %v117 = vpop.f32.mrf.mxu0
    %118 = vdwg.mxu0
    %v119 = vmax.f32 %v111, 0.0
    %v120 = vmax.f32 %v116, 0.0
    %v121 = vld [vmem:[%s5] sm:$0xff]
    %v122 = vld [vmem:[%s5 + $0x8] sm:$0xff]
    %v123 = vmul.f32 %v119, %v121
    %v124 = vmul.f32 %v120, %v122
    %v125 = vld [vmem:[%s3] sm:$0xff]
    %v126 = vld [vmem:[%s3 + $0x8] sm:$0xff]
    %v127 = vld [vmem:[%s3 + $0x10] sm:$0xff]
    %v128 = vld [vmem:[%s4] sm:$0x1]
    %v130 = vlaneseq
    %v131 = vshrl.u32 %v130, 7
    %v132 = vsub.s32 0, %v131
    %v133 = vrot.slane %v128, %v132
    %vm135 = vcmask 195584
    %v137 = vsel %vm135, %v123, 0
    %v140 = vsel %vm135, %v124, 0
    %142 = vmatprep.subr.mxu0 0.0
    %143 = vmatpush1.msra.mxu0 0.0
    %144 = vmatprep.subr.mxu0 0.0
    %145 = vmatpush1.msra.mxu0 0.0
    %146 = vmatprep.subr.mxu0 0.0
    %147 = vmatpush1.msra.mxu0 0.0
    %148 = vmatprep.subr.mxu0 0.0
    %149 = vmatpush1.msra.mxu0 0.0
    %150 = vmatprep.subr.mxu0 0.0
    %151 = vmatpush1.msra.mxu0 0.0
    %152 = vmatprep.subr.mxu0 0.0
    %153 = vmatpush1.msra.mxu0 0.0
    %154 = vmatprep.subr.mxu0 0.0
    %155 = vmatpush1.msra.mxu0 0.0
    %156 = vmatprep.subr.mxu0 0.0
    %157 = vmatpush1.msra.mxu0 0.0
    %158 = vmatprep.subr.mxu0 0.0
    %159 = vmatpush1.msra.mxu0 0.0
    %160 = vmatprep.subr.mxu0 0.0
    %161 = vmatpush1.msra.mxu0 0.0
    %162 = vmatprep.subr.mxu0 0.0
    %163 = vmatpush1.msra.mxu0 0.0
    %164 = vmatprep.subr.mxu0 0.0
    %165 = vmatpush1.msra.mxu0 0.0
    %166 = vmatprep.subr.mxu0 0.0
    %167 = vmatpush1.msra.mxu0 0.0
    %168 = vmatprep.subr.mxu0 0.0
    %169 = vmatpush1.msra.mxu0 %v127
    %170 = vmatprep.subr.mxu0 0.0
    %171 = vmatpush1.msra.mxu0 %v126
    %172 = vmatprep.subr.mxu0 0.0
    %173 = vmatpush1.msra.mxu0 %v125
    %174 = vmatprep.subr.mxu0 0.0
    %175 = vmatpush2.msra.mxu0 0.0
    %176 = vmatprep.subr.mxu0 0.0
    %177 = vmatpush2.msra.mxu0 0.0
    %178 = vmatprep.subr.mxu0 0.0
    %179 = vmatpush2.msra.mxu0 0.0
    %180 = vmatprep.subr.mxu0 0.0
    %181 = vmatpush2.msra.mxu0 0.0
    %182 = vmatprep.subr.mxu0 0.0
    %183 = vmatpush2.msra.mxu0 0.0
    %184 = vmatprep.subr.mxu0 0.0
    %185 = vmatpush2.msra.mxu0 0.0
    %186 = vmatprep.subr.mxu0 0.0
    %187 = vmatpush2.msra.mxu0 0.0
    %188 = vmatprep.subr.mxu0 0.0
    %189 = vmatpush2.msra.mxu0 0.0
    %190 = vmatprep.subr.mxu0 0.0
    %191 = vmatpush2.msra.mxu0 0.0
    %192 = vmatprep.subr.mxu0 0.0
    %193 = vmatpush2.msra.mxu0 0.0
    %194 = vmatprep.subr.mxu0 0.0
    %195 = vmatpush2.msra.mxu0 0.0
    %196 = vmatprep.subr.mxu0 0.0
    %197 = vmatpush2.msra.mxu0 0.0
    %198 = vmatprep.subr.mxu0 0.0
    %199 = vmatpush2.msra.mxu0 0.0
    %200 = vmatprep.subr.mxu0 0.0
    %201 = vmatpush2.msra.mxu0 0.0
    %202 = vmatprep.subr.mxu0 0.0
    %203 = vmatpush2.msra.mxu0 0.0
    %204 = vmatprep.subr.mxu0 0.0
    %205 = vmatpush2.msra.mxu0 0.0
    %206 = vmatprep.mubr.f32.mxu0 0.0
    %207 = vmatmul.mubr.f32.gmra.mxu0 %v137
    %v208 = vpop.f32.mrf.mxu0
    %v209 = vadd.f32 %v133, %v208
    %v210 = vpop.f32.mrf.mxu0
    %211 = vmatprep.mubr.f32.mxu0 0.0
    %212 = vmatmul.mubr.f32.gmra.mxu0 %v140
    %v213 = vpop.f32.mrf.mxu0
    %v214 = vadd.f32 %v133, %v213
    %v215 = vpop.f32.mrf.mxu0
    %216 = vdwg.mxu0
    %vm217 = vcmask 130048
    %218 = vst.msk [vmem:[#allocation2] sm:$0xff] %vm217, %v209
    %219 = vst.msk [vmem:[#allocation2 + $0x8] sm:$0xff] %vm217, %v214
    // Predicated region
    $region26: #{projection_network.1} parent=1 // pred_check
      _
    $region27: #{projection_network.1} parent=1 // pred_check_branch
      %221 = sbr.rel (0) target = $region29
    $region28: #{projection_network.1} parent=1 // pred_region
      %s223 = ssub.s32 256, 256
      %224 = vsyncadd [#allocation3], %s223
      %s225 = sshll.u32 [#allocation2], 4
      %s226 = int_to_ptr.vmem [resolvable:$true] %s225
      %231 = dma.vmem_to_hbm [thread:$0]  %s226, 256, %s6, [#allocation3], 128, 128, 8
    $region29: #{projection_network.1} parent=1 // pred_fallthru
      _
    // Predicated region
    $region30: #{projection_network.1} parent=1 // pred_check
      _
    $region31: #{projection_network.1} parent=1 // pred_check_branch
      %233 = sbr.rel (0) target = $region33
    $region32: #{projection_network.1} parent=1 // pred_region
      %234 = dma.done [#allocation3], 256
    $region33: #{projection_network.1} parent=1 // pred_fallthru
      _
    %235 = vsyncpa [#allocation3], 1

</llo_original>
